<compile_context>
chip_gen: v7x
topology: tpu7x:2x2x1
jax: 0.10.0
libtpu: 0.0.40
codegen_flags: <defaults>
</compile_context>

<pallas_src>
from functools import partial

import numpy as np
import jax
import jax.numpy as jnp
from jax.experimental import pallas as pl
from jax.experimental.pallas import tpu as pltpu

_N = 64  # doppler bins


# --------------------------------------------------------------------------- #
# Import-time probes: can we view complex64 <-> f32 pairs as a pure bitcast?
# (Verified on-device, including the (re, im) byte order.)
# --------------------------------------------------------------------------- #
def _probe_bitcast_down():
    try:
        z = jnp.array([[1.0 + 2.0j, 3.0 - 4.0j]], dtype=jnp.complex64)
        f = np.asarray(jax.block_until_ready(
            jax.lax.bitcast_convert_type(z, jnp.float32)))
        return f.shape == (1, 2, 2) and np.allclose(
            f, [[[1.0, 2.0], [3.0, -4.0]]])
    except Exception:
        return False


def _probe_bitcast_up():
    try:
        f = jnp.array([[[1.0, 2.0], [3.0, -4.0]]], dtype=jnp.float32)
        z = np.asarray(jax.block_until_ready(
            jax.lax.bitcast_convert_type(f, jnp.complex64)))
        return z.shape == (1, 2) and np.allclose(z, [[1.0 + 2.0j, 3.0 - 4.0j]])
    except Exception:
        return False


_BITCAST_DOWN_OK = _probe_bitcast_down()
_BITCAST_UP_OK = _probe_bitcast_up()


# --------------------------------------------------------------------------- #
# Kernel: fused complex DFT linear as one real 128x128 block matmul on the MXU.
# Input rows are complex-interleaved f32; weight is permuted so the output rows
# are complex-interleaved too (bit-identical to complex64).
# --------------------------------------------------------------------------- #
def _cplx_dft_kernel(x_ref, w_ref, o_ref):
    # (tm, 128) f32 -> bf16 cast in VMEM (hidden under DMA), single-pass MXU,
    # f32 accumulation, 128-lane unmasked stores.
    o_ref[...] = jnp.dot(x_ref[...].astype(jnp.bfloat16), w_ref[...],
                         preferred_element_type=jnp.float32)


# --------------------------------------------------------------------------- #
# Row-tile policy (generation aware; HBM/overhead bound => big tiles,
# and >= 2 grid steps for large batches so v7x's 2nd TensorCore is used).
# --------------------------------------------------------------------------- #
def _round_up(a, b):
    return -(-a // b) * b


def _max_row_tile():
    try:
        kind = jax.devices()[0].device_kind.lower()
    except Exception:
        return 1024
    if "v7" in kind:
        return 4096
    if "v6" in kind:
        return 2048
    return 1024  # v5e & older: DMA-time dominated, don't over-grow


def _row_tile(m0):
    tmax = _max_row_tile()
    if m0 >= 2 * tmax:
        return tmax
    if m0 >= 1024:
        # split into exactly 2 big steps (each >= 512 rows) -> both TCs on v7x
        return _round_up((m0 + 1) // 2, 8)
    return _round_up(max(m0, 1), 8)  # tiny batch: one step


# --------------------------------------------------------------------------- #
# complex64 <-> interleaved f32 views (zero-copy bitcast when supported)
# --------------------------------------------------------------------------- #
def _to_interleaved_f32(x2):
    """(m, n) complex64 -> (m, 2n) f32 laid out [re0, im0, re1, im1, ...]."""
    m, n = x2.shape
    if _BITCAST_DOWN_OK:
        xf = jax.lax.bitcast_convert_type(x2, jnp.float32)        # (m, n, 2)
    else:
        xf = jnp.stack([jnp.real(x2), jnp.imag(x2)], axis=-1)      # (m, n, 2)
    return xf.reshape(m, 2 * n)


def _from_interleaved_f32(yf, lead, n):
    """(m, 2n) f32 [re0, im0, ...] -> lead + (n,) complex64."""
    m = yf.shape[0]
    y3 = yf.reshape(m, n, 2)
    if _BITCAST_UP_OK:
        y = jax.lax.bitcast_convert_type(y3, jnp.complex64)        # (m, n)
    else:
        y = jax.lax.complex(y3[..., 0], y3[..., 1])
    return y.reshape(lead + (n,))


# --------------------------------------------------------------------------- #
# Forward wrapper (jit-ed so all glue fuses around the pallas_call)
# --------------------------------------------------------------------------- #
def _forward_impl(x, w_int_bf16, use_pallas):
    lead = x.shape[:-1]
    n = x.shape[-1]
    assert n == _N, f"Doppler_Fourier_Net_Small expects last dim {_N}, got {n}"
    m0 = int(np.prod(lead)) if lead else 1

    x2 = x.astype(jnp.complex64).reshape(m0, n)
    xin = _to_interleaved_f32(x2)                                  # (m0, 128) f32

    if use_pallas:
        tm = _row_tile(m0)
        yout = pl.pallas_call(
            _cplx_dft_kernel,
            out_shape=jax.ShapeDtypeStruct((m0, 2 * n), jnp.float32),
            grid=(pl.cdiv(m0, tm),),
            in_specs=[
                pl.BlockSpec((tm, 2 * n), lambda i: (i, 0)),       # activations
                pl.BlockSpec((2 * n, 2 * n), lambda i: (0, 0)),    # permuted block weight
            ],
            out_specs=pl.BlockSpec((tm, 2 * n), lambda i: (i, 0)),
            compiler_params=pltpu.CompilerParams(
                dimension_semantics=("parallel",)),                # rows independent
        )(xin, w_int_bf16)
    else:
        # tiny-batch fast path: same math, fused XLA dot (no pallas launch cost)
        yout = jnp.dot(xin.astype(jnp.bfloat16), w_int_bf16,
                       preferred_element_type=jnp.float32)

    return _from_interleaved_f32(yout, lead, n)


@partial(jax.jit, static_argnames=("use_pallas",))
def doppler_fourier_forward(x, w_int_bf16, use_pallas=None):
    """y = x @ W^T for the shifted-DFT CplxLinear(64, 64, bias=False)."""
    if use_pallas is None:
        m0 = int(np.prod(x.shape[:-1])) if x.shape[:-1] else 1
        use_pallas = m0 >= 256
    return _forward_impl(x, w_int_bf16, use_pallas)


# --------------------------------------------------------------------------- #
# Weights: shifted DFT matrix of the original module, in block + permuted form
# --------------------------------------------------------------------------- #
def make_doppler_weights():
    N = _N
    j = np.arange(N)
    hh = (np.arange(N) + N // 2) % N                   # fftshift of the output index
    ang = -2.0 * np.pi * np.outer(hh, j) / N           # ang[h, j]
    W = np.exp(1j * ang)                               # exact complex128 W[h, j]
    A = np.cos(ang).T                                  # (W^T).real, indexed [j, h]
    B = np.sin(ang).T                                  # (W^T).imag
    # Block form: [yr | yi] = [xr | xi] @ [[A, B], [-B, A]]
    w_block = np.block([[A, B], [-B, A]])              # (128, 128)
    # Row/column permutation so the kernel consumes/produces the interleaved
    # complex64 byte layout directly: perm = [0, 64, 1, 65, ..., 63, 127].
    perm = np.arange(2 * N).reshape(2, N).T.reshape(-1)
    w_int = w_block[np.ix_(perm, perm)]                # (128, 128), interleaved in/out
    return (jnp.asarray(w_int, dtype=jnp.bfloat16),
            jnp.asarray(A, dtype=jnp.float32),
            jnp.asarray(B, dtype=jnp.float32),
            W)


# --------------------------------------------------------------------------- #
# Pure-JAX reference (same bf16-operand / f32-accumulate arithmetic)
# --------------------------------------------------------------------------- #
@jax.jit
def reference_forward(x_cplx, wr_t, wi_t):
    lead = x_cplx.shape[:-1]
    n = x_cplx.shape[-1]
    xr = jnp.real(x_cplx).reshape(-1, n).astype(jnp.bfloat16)
    xi = jnp.imag(x_cplx).reshape(-1, n).astype(jnp.bfloat16)
    A = wr_t.astype(jnp.bfloat16)
    B = wi_t.astype(jnp.bfloat16)
    yr = (jnp.dot(xr, A, preferred_element_type=jnp.float32)
          - jnp.dot(xi, B, preferred_element_type=jnp.float32))
    yi = (jnp.dot(xr, B, preferred_element_type=jnp.float32)
          + jnp.dot(xi, A, preferred_element_type=jnp.float32))
    return (yr + 1j * yi).astype(jnp.complex64).reshape(lead + (n,))


if __name__ == "__main__":
    w_int_bf16, wr_t, wi_t, W_exact = make_doppler_weights()

    key = jax.random.PRNGKey(0)
    k_r, k_i = jax.random.split(key, 2)

    # (batch=2, range_bins=16, doppler_chirps=64) complex input; the CplxLinear
    # acts on the last (64-wide) axis exactly like nn.Linear.
    shape = (2, 16, 64)
    x = (jax.random.normal(k_r, shape, jnp.float32)
         + 1j * jax.random.normal(k_i, shape, jnp.float32)).astype(jnp.complex64)

    # --- Pallas path (forced, so the kernel is exercised at the demo size) ---
    out = jax.block_until_ready(doppler_fourier_forward(x, w_int_bf16, use_pallas=True))
    assert out.shape == shape and out.dtype == jnp.complex64, (out.shape, out.dtype)

    # 1) Tight check vs a pure-JAX implementation using identical bf16/f32 math.
    ref = jax.block_until_ready(reference_forward(x, wr_t, wi_t))
    np.testing.assert_allclose(np.asarray(out), np.asarray(ref), rtol=2e-3, atol=2e-3)

    # 2) Semantic check vs the exact (float64) shifted DFT: y = x @ W^T.
    x_np = np.asarray(x).astype(np.complex128)
    y_exact = x_np.reshape(-1, _N) @ W_exact.T
    rel_l2 = (np.linalg.norm(np.asarray(out).reshape(-1, _N) - y_exact)
              / np.linalg.norm(y_exact))
    assert rel_l2 < 2e-2, rel_l2

    # 3) Small-batch XLA fast path (auto mode) matches the kernel.
    out_fast = jax.block_until_ready(doppler_fourier_forward(x, w_int_bf16))
    np.testing.assert_allclose(np.asarray(out_fast), np.asarray(ref),
                               rtol=2e-3, atol=2e-3)

    # 4) Multi-tile path: m0 = 1024 rows -> 2-step "parallel" grid (both TCs on v7x).
    shape2 = (4, 256, 64)
    x2 = (jax.random.normal(k_r, shape2, jnp.float32)
          + 1j * jax.random.normal(k_i, shape2, jnp.float32)).astype(jnp.complex64)
    out2 = jax.block_until_ready(doppler_fourier_forward(x2, w_int_bf16, use_pallas=True))
    ref2 = jax.block_until_ready(reference_forward(x2, wr_t, wi_t))
    np.testing.assert_allclose(np.asarray(out2), np.asarray(ref2), rtol=2e-3, atol=2e-3)

    print("KERNEL_OK")
</pallas_src>

<mosaic_0001>
module attributes {stable_mosaic.version = 11 : i64} {
  func.func @_cplx_dft_kernel(%arg0: i32, %arg1: memref<32x128xf32, #tpu.memory_space<vmem>>, %arg2: memref<128x128xbf16, #tpu.memory_space<vmem>>, %arg3: memref<32x128xf32, #tpu.memory_space<vmem>>) attributes {dimension_semantics = [#tpu.dimension_semantics<parallel>], iteration_bounds = array<i64: 1>, scalar_prefetch = 0 : i64, scratch_operands = 0 : i64, tpu.core_type = #tpu.core_type<tc>, window_params = [{transform_indices = @transform_0, window_bounds = array<i64: 32, 128>}, {pipeline_mode = #tpu.pipeline_mode<synchronous>, transform_indices = @transform_1, window_bounds = array<i64: 128, 128>}, {transform_indices = @transform_2, window_bounds = array<i64: 32, 128>}]} {
    %c0 = arith.constant 0 : index
    %c0_0 = arith.constant 0 : index
    %0 = vector.load %arg1[%c0, %c0_0] : memref<32x128xf32, #tpu.memory_space<vmem>>, vector<32x128xf32>
    %1 = arith.truncf %0 : vector<32x128xf32> to vector<32x128xbf16>
    %c0_1 = arith.constant 0 : index
    %c0_2 = arith.constant 0 : index
    %2 = vector.load %arg2[%c0_1, %c0_2] : memref<128x128xbf16, #tpu.memory_space<vmem>>, vector<128x128xbf16>
    %cst = arith.constant dense<0.000000e+00> : vector<32x128xf32>
    %3 = tpu.matmul %1, %2, %cst {dimension_numbers = #tpu.dot_dimension_numbers<[1], [0], [0], [1], [0, 0, 1, 1], [], []>} : vector<32x128xbf16>, vector<128x128xbf16>, vector<32x128xf32> -> vector<32x128xf32>
    %c0_3 = arith.constant 0 : index
    %c0_4 = arith.constant 0 : index
    %4 = vector.load %arg3[%c0_3, %c0_4] : memref<32x128xf32, #tpu.memory_space<vmem>>, vector<32x128xf32>
    tpu.vector_store %arg3[%c0_3, %c0_4], %3 {strides = array<i32>} : memref<32x128xf32, #tpu.memory_space<vmem>>, vector<32x128xf32>,
    return
  }
  func.func @transform_0(%arg0: i32) -> (i32, i32) {
    %c0_i32 = arith.constant 0 : i32
    %c0_i32_0 = arith.constant 0 : i32
    return %arg0, %c0_i32 : i32, i32
  }
  func.func @transform_1(%arg0: i32) -> (i32, i32) {
    %c0_i32 = arith.constant 0 : i32
    %c0_i32_0 = arith.constant 0 : i32
    %c0_i32_1 = arith.constant 0 : i32
    return %c0_i32, %c0_i32_0 : i32, i32
  }
  func.func @transform_2(%arg0: i32) -> (i32, i32) {
    %c0_i32 = arith.constant 0 : i32
    %c0_i32_0 = arith.constant 0 : i32
    return %arg0, %c0_i32 : i32, i32
  }
}

</mosaic_0001>

<llo_original>
// kernel: custom-call
$region0: #{custom-call}
  %s0 = inlined_call_operand.hbm [shape: c64[2,16,64], index: 0, kind: input, shape index: {}]
  %s1 = inlined_call_operand.vmem [shape: f32[2,16,64], index: 1, kind: output, shape index: {}]
  $region1: #{custom-call} parent=0
    #allocation0 [shape = 's32[1]{0}', space=sflag, size = 0x4, scoped, tag = 'scoped memory for custom-call']
    %2 = vsyncpa [#allocation0], 0
    %s3 = sshll.u32 %s1, 4
    %s4 = int_to_ptr.vmem [resolvable:$true] %s3
    %6 = dma.hbm_to_vmem [thread:$0]  %s0, 512, %s4, [#allocation0]
    %7 = dma.done [#allocation0], 512
    %8 = vsyncpa [#allocation0], 1

// kernel: custom-call.1
$region0: #{custom-call.1}
  %s0 = inlined_call_operand.hbm [shape: c64[2,16,64], index: 0, kind: input, shape index: {}]
  %s1 = inlined_call_operand.vmem [shape: f32[2,16,64], index: 1, kind: output, shape index: {}]
  %s2 = scalar_lea.hbm %s0, 512
  $region1: #{custom-call.1} parent=0
    #allocation0 [shape = 's32[1]{0}', space=sflag, size = 0x4, scoped, tag = 'scoped memory for custom-call.1']
    %3 = vsyncpa [#allocation0], 0
    %s4 = sshll.u32 %s1, 4
    %s5 = int_to_ptr.vmem [resolvable:$true] %s4
    %7 = dma.hbm_to_vmem [thread:$0]  %s2, 512, %s5, [#allocation0]
    %8 = dma.done [#allocation0], 512
    %9 = vsyncpa [#allocation0], 1

// kernel: custom-call.2
$region0: #{custom-call.2}
  %s0 = inlined_call_operand.vmem [shape: f32[2,16,64], index: 0, kind: input, shape index: {}]
  %s1 = inlined_call_operand.vmem [shape: f32[2,16,64], index: 1, kind: input, shape index: {}]
  %s2 = inlined_call_operand.hbm [shape: c64[2,16,64], index: 2, kind: output, shape index: {}]
  %s3 = scalar_lea.hbm %s2, 512
  $region1: #{custom-call.2} parent=0
    #allocation0 [shape = 's32[1]{0}', space=sflag, size = 0x4, scoped, tag = 'scoped memory for custom-call.2']
    %4 = vsyncpa [#allocation0], 0
    %s5 = sshll.u32 %s0, 4
    %s6 = int_to_ptr.vmem [resolvable:$true] %s5
    %8 = dma.vmem_to_hbm [thread:$0]  %s6, 512, %s2, [#allocation0]
    %9 = dma.done [#allocation0], 512
    %10 = vsyncpa [#allocation0], 1
  $region2: #{custom-call.2} parent=0
    #allocation1 [shape = 's32[1]{0}', space=sflag, size = 0x4, scoped, tag = 'scoped memory for custom-call.2']
    %11 = vsyncpa [#allocation1], 0
    %s12 = sshll.u32 %s1, 4
    %s13 = int_to_ptr.vmem [resolvable:$true] %s12
    %15 = dma.vmem_to_hbm [thread:$0]  %s13, 512, %s3, [#allocation1]
    %16 = dma.done [#allocation1], 512
    %17 = vsyncpa [#allocation1], 1

// kernel: doppler_fourier_forward.1
$region0: #{doppler_fourier_forward.1}
  #allocation0 [shape = 'u32[]', space=smem, size = 0x4, offset = 0x4, fixed_abs, tag = 'smem constant byte address 0x4 - core index']
  #allocation1 [shape = 'u32[144,128]{1,0:T(1,128)}', space=vmem, size = 0x12000, scoped, tag = 'internal scratch']
  %s0 = inlined_call_operand.vmem [shape: f32[32,128], index: 0, kind: input, shape index: {}]
  %s1 = inlined_call_operand.vmem [shape: bf16[128,128], index: 1, kind: input, shape index: {}]
  %s2 = inlined_call_operand.vmem [shape: f32[32,128], index: 2, kind: output, shape index: {}]
  %s3 = sld [smem:[#allocation0]]
  $region18: #{doppler_fourier_forward.1} parent=0
    _
  %s5 = ssub.s32 1, %s3
  %s6 = scalar_select 0, %s5, %s3
  // Predicated region
  $region2: #{doppler_fourier_forward.1} parent=0 // pred_check
    _
  $region3: #{doppler_fourier_forward.1} parent=0 // pred_check_branch
    %8 = sbr.rel (0) target = $region5
  $region4: #{doppler_fourier_forward.1} parent=0 // pred_region
    _
  $region5: #{doppler_fourier_forward.1} parent=0 // pred_fallthru
    _
  // Predicated region
  $region6: #{doppler_fourier_forward.1} parent=0 // pred_check
    _
  $region7: #{doppler_fourier_forward.1} parent=0 // pred_check_branch
    %10 = sbr.rel (0) target = $region9
  $region8: #{doppler_fourier_forward.1} parent=0 // pred_region
    _
  $region9: #{doppler_fourier_forward.1} parent=0 // pred_fallthru
    _
  %v12 = vld [vmem:[%s0] sm:$0xff]
  %v13 = vld [vmem:[%s0 + $0x8] sm:$0xff]
  %v14 = vld [vmem:[%s0 + $0x10] sm:$0xff]
  %v15 = vld [vmem:[%s0 + $0x18] sm:$0xff]
  %v16 = vpack.c.bf16 %v13, %v12
  %v17 = vpack.c.bf16 %v15, %v14
  %v18 = vld [vmem:[%s1] sm:$0xf]
  %v19 = vld [vmem:[%s1 + $0x4] sm:$0xf]
  %v20 = vld [vmem:[%s1 + $0x8] sm:$0xf]
  %v21 = vld [vmem:[%s1 + $0xc] sm:$0xf]
  %v22 = vld [vmem:[%s1 + $0x10] sm:$0xf]
  %v23 = vld [vmem:[%s1 + $0x14] sm:$0xf]
  %v24 = vld [vmem:[%s1 + $0x18] sm:$0xf]
  %v25 = vld [vmem:[%s1 + $0x1c] sm:$0xf]
  %v26 = vld [vmem:[%s1 + $0x20] sm:$0xf]
  %v27 = vld [vmem:[%s1 + $0x24] sm:$0xf]
  %v28 = vld [vmem:[%s1 + $0x28] sm:$0xf]
  %v29 = vld [vmem:[%s1 + $0x2c] sm:$0xf]
  %v30 = vld [vmem:[%s1 + $0x30] sm:$0xf]
  %v31 = vld [vmem:[%s1 + $0x34] sm:$0xf]
  %v32 = vld [vmem:[%s1 + $0x38] sm:$0xf]
  %v33 = vld [vmem:[%s1 + $0x3c] sm:$0xf]
  %v50 = vunpack.c.l.b16 %v18
  %v51 = vunpack.c.l.b16 %v19
  %v52 = vunpack.c.l.b16 %v20
  %v53 = vunpack.c.l.b16 %v21
  %v54 = vunpack.c.l.b16 %v22
  %v55 = vunpack.c.l.b16 %v23
  %v56 = vunpack.c.l.b16 %v24
  %v57 = vunpack.c.l.b16 %v25
  %v58 = vunpack.c.l.b16 %v26
  %v59 = vunpack.c.l.b16 %v27
  %v60 = vunpack.c.l.b16 %v28
  %v61 = vunpack.c.l.b16 %v29
  %v62 = vunpack.c.l.b16 %v30
  %v63 = vunpack.c.l.b16 %v31
  %v64 = vunpack.c.l.b16 %v32
  %v65 = vunpack.c.l.b16 %v33
  %v66 = vpack.c.b16 %v51, %v50
  %v67 = vpack.c.b16 %v53, %v52
  %v68 = vpack.c.b16 %v55, %v54
  %v69 = vpack.c.b16 %v57, %v56
  %v70 = vpack.c.b16 %v59, %v58
  %v71 = vpack.c.b16 %v61, %v60
  %v72 = vpack.c.b16 %v63, %v62
  %v73 = vpack.c.b16 %v65, %v64
  %82 = vmatprep.subr.bf16.mxu0 0
  %83 = vmatpush1.bf16.msra.mxu0 %v66
  %84 = vmatprep.subr.bf16.mxu0 0
  %85 = vmatpush1.bf16.msra.mxu0 %v67
  %86 = vmatprep.subr.bf16.mxu0 0
  %87 = vmatpush1.bf16.msra.mxu0 %v68
  %88 = vmatprep.subr.bf16.mxu0 0
  %89 = vmatpush1.bf16.msra.mxu0 %v69
  %90 = vmatprep.subr.bf16.mxu0 0
  %91 = vmatpush1.bf16.msra.mxu0 %v70
  %92 = vmatprep.subr.bf16.mxu0 0
  %93 = vmatpush1.bf16.msra.mxu0 %v71
  %94 = vmatprep.subr.bf16.mxu0 0
  %95 = vmatpush1.bf16.msra.mxu0 %v72
  %96 = vmatprep.subr.bf16.mxu0 0
  %97 = vmatpush1.bf16.msra.mxu0 %v73
  %98 = vmatprep.subr.bf16.mxu0 0
  %99 = vmatpush1.bf16.msra.mxu0 0
  %100 = vmatprep.subr.bf16.mxu0 0
  %101 = vmatpush1.bf16.msra.mxu0 0
  %102 = vmatprep.subr.bf16.mxu0 0
  %103 = vmatpush1.bf16.msra.mxu0 0
  %104 = vmatprep.subr.bf16.mxu0 0
  %105 = vmatpush1.bf16.msra.mxu0 0
  %106 = vmatprep.subr.bf16.mxu0 0
  %107 = vmatpush1.bf16.msra.mxu0 0
  %108 = vmatprep.subr.bf16.mxu0 0
  %109 = vmatpush1.bf16.msra.mxu0 0
  %110 = vmatprep.subr.bf16.mxu0 0
  %111 = vmatpush1.bf16.msra.mxu0 0
  %112 = vmatprep.subr.bf16.mxu0 0
  %113 = vmatpush1.bf16.msra.mxu0 0
  %114 = vmatprep.mubr.bf16.mxu0 0
  %115 = vmatmul.mubr.bf16.gmra.mrb[0].mxu0 %v16
  %v116 = vpop.f32.mrb[0].mxu0
  %v117 = vadd.f32 0.0, %v116
  %v118 = vpop.f32.mrb[0].mxu0
  %v119 = vpop.f32.mrb[0].mxu0
  %v120 = vadd.f32 0.0, %v119
  %v121 = vpop.f32.mrb[0].mxu0
  %122 = vmatprep.mubr.bf16.mxu0 0
  %123 = vmatmul.mubr.bf16.gmra.mrb[0].mxu0 %v17
  %v124 = vpop.f32.mrb[0].mxu0
  %v125 = vadd.f32 0.0, %v124
  %v126 = vpop.f32.mrb[0].mxu0
  %v127 = vpop.f32.mrb[0].mxu0
  %v128 = vadd.f32 0.0, %v127
  %v129 = vpop.f32.mrb[0].mxu0
  %130 = vdwg.mxu0
  %131 = vst [vmem:[%s2] sm:$0xff] %v117
  %132 = vst [vmem:[%s2 + $0x8] sm:$0xff] %v120
  %133 = vst [vmem:[%s2 + $0x10] sm:$0xff] %v125
  %134 = vst [vmem:[%s2 + $0x18] sm:$0xff] %v128
  // Predicated region
  $region10: #{doppler_fourier_forward.1} parent=0 // pred_check
    _
  $region11: #{doppler_fourier_forward.1} parent=0 // pred_check_branch
    %136 = sbr.rel (0) target = $region13
  $region12: #{doppler_fourier_forward.1} parent=0 // pred_region
    _
  $region13: #{doppler_fourier_forward.1} parent=0 // pred_fallthru
    _
  // Predicated region
  $region14: #{doppler_fourier_forward.1} parent=0 // pred_check
    _
  $region15: #{doppler_fourier_forward.1} parent=0 // pred_check_branch
    %138 = sbr.rel (0) target = $region17
  $region16: #{doppler_fourier_forward.1} parent=0 // pred_region
    _
  $region17: #{doppler_fourier_forward.1} parent=0 // pred_fallthru
    _

</llo_original>
